<compile_context>
chip_gen: v7x
topology: tpu7x:2x2x1
jax: 0.10.0
libtpu: 0.0.40
codegen_flags: <defaults>
</compile_context>

<pallas_src>
import jax
import jax.numpy as jnp
from jax.experimental import pallas as pl
from jax.experimental.pallas import tpu as pltpu


def _hsigmoid_kernel(x_ref, o_ref):
    x = x_ref[...]
    # relu6(x + 3) / 3  == clamp(x + 3, 0, 6) * (1/3)
    y = jnp.minimum(jnp.maximum(x + 3.0, 0.0), 6.0) * (1.0 / 3.0)
    o_ref[...] = y.astype(o_ref.dtype)


def _tpu_defaults():
    """(target_block_bytes, vmem_limit_bytes) per TPU generation."""
    try:
        kind = jax.devices()[0].device_kind.lower()
    except Exception:  # pragma: no cover - CPU / interpret fallback
        kind = ""
    if "v5" in kind:
        # v5e: ~0.8 TB/s HBM -> a 4 MiB step is ~10 us, overhead already <5%.
        return 4 << 20, 32 << 20
    # v6e / v7x: faster HBM makes the ~0.35 us/step overhead relatively
    # expensive; 8 MiB blocks halve it.  Footprint 32 MiB << 64 MiB (v7x).
    return 8 << 20, 48 << 20


def hsigmoid(x, *, min_pallas_bytes=1 << 20, donate=False):
    """Elementwise Hsigmoid (relu6(x+3)/3) on an arbitrarily-shaped array."""
    orig_shape = x.shape
    orig_dtype = x.dtype
    n = x.size
    if n == 0:
        return x

    itemsize = jnp.dtype(orig_dtype).itemsize
    total_bytes = n * itemsize

    # Tiny activation tensors: a single fused XLA elementwise op beats the
    # pallas_call fixed cost.
    if total_bytes < min_pallas_bytes:
        return (jnp.clip(x + 3.0, 0.0, 6.0) * (1.0 / 3.0)).astype(orig_dtype)

    target_block_bytes, vmem_limit = _tpu_defaults()

    # Native sublane packing: 8 rows for 4-byte, 16 for 2-byte, 32 for 1-byte.
    sublane = max(8, 32 // itemsize)

    # Widest lane (multiple of 128) that divides n exactly -> zero padding.
    lane = None
    for cand in (1024, 512, 256, 128):
        if n % cand == 0:
            lane = cand
            break

    flat = x.reshape(-1)
    padded = False
    if lane is None:
        # Rare: pad by < 128 elements to a lane multiple (still far cheaper
        # than padding to a full block grid).
        lane = 128
        pad = pl.cdiv(n, lane) * lane - n
        flat = jnp.pad(flat, (0, pad))
        padded = True
    rows = flat.size // lane

    # Rows per block: aim for ~target_block_bytes, dtype-aware sublane multiple.
    target_rows = max(
        sublane, (target_block_bytes // (lane * itemsize)) // sublane * sublane
    )
    if rows <= sublane:
        tile_rows = rows  # single full-extent block (allowed: equals array dim)
    else:
        tile_rows = min(target_rows, pl.cdiv(rows, sublane) * sublane)
        # Ensure >= 2 grid steps: v7x megacore sharding + DMA/compute overlap.
        if pl.cdiv(rows, tile_rows) < 2:
            tile_rows = max(sublane, pl.cdiv(pl.cdiv(rows, 2), sublane) * sublane)
    num_steps = pl.cdiv(rows, tile_rows)  # partial last block is masked

    extra = {}
    if donate:
        # Caller donates x: write the result into the same HBM buffer.
        extra["input_output_aliases"] = {0: 0}

    out = pl.pallas_call(
        _hsigmoid_kernel,
        out_shape=jax.ShapeDtypeStruct((rows, lane), orig_dtype),
        grid_spec=pltpu.PrefetchScalarGridSpec(
            num_scalar_prefetch=0,
            grid=(num_steps,),
            in_specs=[pl.BlockSpec((tile_rows, lane), lambda i: (i, 0))],
            out_specs=pl.BlockSpec((tile_rows, lane), lambda i: (i, 0)),
        ),
        compiler_params=pltpu.CompilerParams(
            dimension_semantics=("parallel",),
            vmem_limit_bytes=vmem_limit,
        ),
        **extra,
    )(flat.reshape(rows, lane))

    out = out.reshape(-1)
    if padded:
        out = out[:n]
    return out.reshape(orig_shape)


def hsigmoid_ref(x):
    return jnp.clip(x + 3.0, 0.0, 6.0) / 3.0


if __name__ == "__main__":
    key = jax.random.PRNGKey(0)
    # NCHW, small shapes consistent with a conv-net activation tensor.
    x = jax.random.normal(key, (2, 4, 16, 16), dtype=jnp.float32) * 4.0

    # Force the Pallas path (this tiny tensor would otherwise take the cheap
    # jnp fallback) so the kernel itself is exercised.
    y = hsigmoid(x, min_pallas_bytes=0)
    y = jax.block_until_ready(y)

    y_ref = hsigmoid_ref(x)
    assert y.shape == x.shape and y.dtype == x.dtype
    assert jnp.allclose(y, y_ref, atol=1e-6, rtol=1e-6)

    # Default path (small-tensor short-circuit) must agree as well.
    y2 = jax.block_until_ready(hsigmoid(x))
    assert jnp.allclose(y2, y_ref, atol=1e-6, rtol=1e-6)

    print("KERNEL_OK")
</pallas_src>

<mosaic_0001>
module attributes {stable_mosaic.version = 11 : i64} {
  func.func @_hsigmoid_kernel(%arg0: i32, %arg1: memref<2x1024xf32, #tpu.memory_space<vmem>>, %arg2: memref<2x1024xf32, #tpu.memory_space<vmem>>) attributes {dimension_semantics = [#tpu.dimension_semantics<parallel>], iteration_bounds = array<i64: 1>, scalar_prefetch = 0 : i64, scratch_operands = 0 : i64, tpu.core_type = #tpu.core_type<tc>, window_params = [{transform_indices = @transform_0, window_bounds = array<i64: 2, 1024>}, {transform_indices = @transform_1, window_bounds = array<i64: 2, 1024>}]} {
    %c0 = arith.constant 0 : index
    %c0_0 = arith.constant 0 : index
    %0 = vector.load %arg1[%c0, %c0_0] : memref<2x1024xf32, #tpu.memory_space<vmem>>, vector<2x1024xf32>
    %cst = arith.constant 3.000000e+00 : f32
    %1 = vector.broadcast %cst : f32 to vector<2x1024xf32>
    %2 = arith.addf %0, %1 : vector<2x1024xf32>
    %cst_1 = arith.constant 0.000000e+00 : f32
    %3 = vector.broadcast %cst_1 : f32 to vector<2x1024xf32>
    %4 = arith.maximumf %2, %3 : vector<2x1024xf32>
    %cst_2 = arith.constant 6.000000e+00 : f32
    %5 = vector.broadcast %cst_2 : f32 to vector<2x1024xf32>
    %6 = arith.minimumf %4, %5 : vector<2x1024xf32>
    %cst_3 = arith.constant 0.333333343 : f32
    %7 = vector.broadcast %cst_3 : f32 to vector<2x1024xf32>
    %8 = arith.mulf %6, %7 : vector<2x1024xf32>
    %c0_4 = arith.constant 0 : index
    %c0_5 = arith.constant 0 : index
    %9 = vector.load %arg2[%c0_4, %c0_5] : memref<2x1024xf32, #tpu.memory_space<vmem>>, vector<2x1024xf32>
    tpu.vector_store %arg2[%c0_4, %c0_5], %8 {strides = array<i32>} : memref<2x1024xf32, #tpu.memory_space<vmem>>, vector<2x1024xf32>,
    return
  }
  func.func @transform_0(%arg0: i32) -> (i32, i32) {
    %c0_i32 = arith.constant 0 : i32
    %c0_i32_0 = arith.constant 0 : i32
    return %arg0, %c0_i32 : i32, i32
  }
  func.func @transform_1(%arg0: i32) -> (i32, i32) {
    %c0_i32 = arith.constant 0 : i32
    %c0_i32_0 = arith.constant 0 : i32
    return %arg0, %c0_i32 : i32, i32
  }
}

</mosaic_0001>

<llo_original>
// kernel: tpu_custom_call.1
$region0: #{tpu_custom_call.1}
  #allocation0 [shape = 'u32[]', space=smem, size = 0x4, offset = 0x4, fixed_abs, tag = 'smem constant byte address 0x4 - core index']
  #allocation1 [shape = 'u32[144,128]{1,0:T(1,128)}', space=vmem, size = 0x12000, scoped, tag = 'internal scratch']
  %s0 = inlined_call_operand.hbm [shape: f32[2,1024], index: 0, kind: input, shape index: {}]
  %s1 = inlined_call_operand.hbm [shape: f32[2,1024], index: 1, kind: output, shape index: {}]
  %s2 = sld [smem:[#allocation0]]
  $region18: #{tpu_custom_call.1} parent=0
    _
  %s4 = ssub.s32 1, %s2
  %s5 = scalar_select 0, %s4, %s2
  $region1: #{tpu_custom_call.1} parent=0
    #allocation2 [shape = 'u8[8192]{0}', space=vmem, size = 0x2000, scoped, tag = 'input window, operand 0, single buffered']
    #allocation3 [shape = 's32[1]{0}', space=sflag, size = 0x4, scoped, tag = 'scoped memory for tpu_custom_call.1']
    #allocation4 [shape = 's32[1]{0}', space=sflag, size = 0x4, scoped, tag = 'scoped memory for tpu_custom_call.1']
    #allocation5 [shape = 'u8[8192]{0}', space=vmem, size = 0x2000, scoped, tag = 'output window, operand 0, single buffered']
    %6 = vsyncpa [#allocation3], 0
    %7 = vsyncpa [#allocation4], 0
    // Predicated region
    $region2: #{tpu_custom_call.1} parent=1 // pred_check
      _
    $region3: #{tpu_custom_call.1} parent=1 // pred_check_branch
      %9 = sbr.rel (0) target = $region5
    $region4: #{tpu_custom_call.1} parent=1 // pred_region
      %s11 = ssub.s32 256, 256
      %12 = vsyncadd [#allocation3], %s11
      %s14 = sshll.u32 [#allocation2], 4
      %s15 = int_to_ptr.vmem [resolvable:$true] %s14
      %17 = dma.hbm_to_vmem [thread:$0]  %s0, 256, %s15, [#allocation3]
    $region5: #{tpu_custom_call.1} parent=1 // pred_fallthru
      _
    // Predicated region
    $region6: #{tpu_custom_call.1} parent=1 // pred_check
      _
    $region7: #{tpu_custom_call.1} parent=1 // pred_check_branch
      %19 = sbr.rel (0) target = $region9
    $region8: #{tpu_custom_call.1} parent=1 // pred_region
      %20 = dma.done [#allocation3], 256
    $region9: #{tpu_custom_call.1} parent=1 // pred_fallthru
      _
    %v21 = vld [vmem:[#allocation2] sm:$0xff]
    %v22 = vld [vmem:[#allocation2 + $0x8] sm:$0xff]
    %v23 = vadd.f32 %v21, 3.0
    %v24 = vadd.f32 %v22, 3.0
    %v25 = vmax.f32 %v23, 0.0
    %v26 = vmax.f32 %v24, 0.0
    %v27 = vmin.f32 %v25, 6.0
    %v28 = vmin.f32 %v26, 6.0
    %v29 = vmul.f32 %v27, 0.33333334
    %v30 = vmul.f32 %v28, 0.33333334
    %31 = vst [vmem:[#allocation5] sm:$0xff] %v29
    %32 = vst [vmem:[#allocation5 + $0x8] sm:$0xff] %v30
    // Predicated region
    $region10: #{tpu_custom_call.1} parent=1 // pred_check
      _
    $region11: #{tpu_custom_call.1} parent=1 // pred_check_branch
      %34 = sbr.rel (0) target = $region13
    $region12: #{tpu_custom_call.1} parent=1 // pred_region
      %s36 = ssub.s32 256, 256
      %37 = vsyncadd [#allocation4], %s36
      %s39 = sshll.u32 [#allocation5], 4
      %s40 = int_to_ptr.vmem [resolvable:$true] %s39
      %42 = dma.vmem_to_hbm [thread:$0]  %s40, 256, %s1, [#allocation4]
    $region13: #{tpu_custom_call.1} parent=1 // pred_fallthru
      _
    // Predicated region
    $region14: #{tpu_custom_call.1} parent=1 // pred_check
      _
    $region15: #{tpu_custom_call.1} parent=1 // pred_check_branch
      %44 = sbr.rel (0) target = $region17
    $region16: #{tpu_custom_call.1} parent=1 // pred_region
      %45 = dma.done [#allocation4], 256
    $region17: #{tpu_custom_call.1} parent=1 // pred_fallthru
      _
    %46 = vsyncpa [#allocation3], 1
    %47 = vsyncpa [#allocation4], 1

</llo_original>
